<compile_context>
chip_gen: v6e
topology: v6e:2x2x1
jax: 0.10.0
libtpu: 0.0.40
codegen_flags: <defaults>
</compile_context>

<pallas_src>
import functools

import jax
import jax.numpy as jnp
from jax.experimental import pallas as pl
from jax.experimental.pallas import tpu as pltpu


def _round_up(a, b):
    return (a + b - 1) // b * b


def _pick_row_tile(h):
    """Largest row tile <= 512 that divides H (amortizes ~0.35us/step); H if small."""
    if h <= 512:
        return h
    for cand in (512, 384, 256, 128, 64, 32, 16, 8):
        if h % cand == 0:
            return cand
    # TODO(synk): pad H for large sizes with awkward divisors; full-H block is
    #             still correct, just VMEM-hungry.
    return h


def _freq_kernel(x_ref, m_ref, o_ref, acc_ref):
    # x_ref  : (TH, W)       rows of x for one (batch, h-tile, in-channel)
    # m_ref  : (W, N_pad)    folded DFT+weight slab for this in-channel
    # o_ref  : (TH, N_pad)   output rows (written once, on the last channel)
    # acc_ref: VMEM f32 accumulator, resident across the C_in grid axis
    i = pl.program_id(2)

    @pl.when(i == 0)
    def _():
        acc_ref[...] = jnp.zeros_like(acc_ref)

    acc_ref[...] += jnp.dot(
        x_ref[...], m_ref[...],
        preferred_element_type=jnp.float32,
        precision=jax.lax.Precision.HIGHEST)

    @pl.when(i == pl.num_programs(2) - 1)
    def _():
        o_ref[...] = acc_ref[...]


def fold_frequency_weights(w_real, w_imag, width):
    """Fold truncated ortho rfft + complex spectral weights into one real tensor.

    Returns M of shape (C_in, W, N_pad) with columns [Re | Im | 0-pad],
    N_pad = lane-dense multiple of 128.  Compute ONCE per weight update.
    """
    c_in, c_out, k = w_real.shape
    assert k <= width // 2 + 1, "mode must not exceed rfft length"

    # F[n, k] = exp(-2*pi*i*n*k/W) / sqrt(W)   (ortho norm, truncated to k modes)
    n_idx = jnp.arange(width, dtype=jnp.float32)[:, None]
    k_idx = jnp.arange(k, dtype=jnp.float32)[None, :]
    ang = (2.0 * jnp.pi / float(width)) * n_idx * k_idx
    scale = 1.0 / jnp.sqrt(jnp.float32(width))
    fr = jnp.cos(ang) * scale          # Re(F)
    fi = -jnp.sin(ang) * scale         # Im(F)

    # M[(i), n, (o,k)] = F[n,k] * W[i,o,k]
    m_real = (fr[None, :, None, :] * w_real[:, None, :, :]
              - fi[None, :, None, :] * w_imag[:, None, :, :])
    m_imag = (fr[None, :, None, :] * w_imag[:, None, :, :]
              + fi[None, :, None, :] * w_real[:, None, :, :])
    m_real = m_real.reshape(c_in, width, c_out * k)
    m_imag = m_imag.reshape(c_in, width, c_out * k)

    n_out = 2 * c_out * k
    n_pad = max(128, _round_up(n_out, 128))    # lane-dense, v5e-friendly (no over-pad)
    m_cat = jnp.concatenate([m_real, m_imag], axis=-1)
    m_cat = jnp.pad(m_cat, ((0, 0), (0, 0), (0, n_pad - n_out)))
    return m_cat


def frequency_encoder_fwd(x, m_folded, *, c_out, mode):
    """x: (B, C_in, H, W) f32; m_folded: (C_in, W, N_pad) from fold_frequency_weights.

    Returns complex64 (B, C_out, H, mode): PyTorch 4D forward, normalize=False.
    """
    b, c_in, h, w = x.shape
    assert m_folded.shape[0] == c_in and m_folded.shape[1] == w
    n_pad = m_folded.shape[2]
    n_out = 2 * c_out * mode
    assert n_out <= n_pad

    th = _pick_row_tile(h)
    grid = (b, h // th, c_in)

    # Explicit VMEM budget (double-buffered x/M/out blocks + f32 accumulator).
    need = (2 * (th * w + w * n_pad + th * n_pad) + th * n_pad) * 4
    vmem_limit = int(max(16 * 1024 * 1024, min(2 * need, 96 * 1024 * 1024)))

    out2 = pl.pallas_call(
        _freq_kernel,
        out_shape=jax.ShapeDtypeStruct((b, h, n_pad), jnp.float32),
        grid=grid,
        in_specs=[
            # x in its natural NCHW layout: one (TH, W) slab per (b, h-tile, i).
            pl.BlockSpec((None, None, th, w), lambda bi, hi, ii: (bi, ii, hi, 0)),
            # folded matrix slab for in-channel i.
            pl.BlockSpec((None, w, n_pad), lambda bi, hi, ii: (ii, 0, 0)),
        ],
        out_specs=pl.BlockSpec((None, th, n_pad), lambda bi, hi, ii: (bi, hi, 0)),
        scratch_shapes=[pltpu.VMEM((th, n_pad), jnp.float32)],
        compiler_params=pltpu.CompilerParams(
            dimension_semantics=("parallel", "parallel", "arbitrary"),
            vmem_limit_bytes=vmem_limit),
    )(x, m_folded)

    # Unpack lane-dense [Re | Im | pad] columns -> complex (B, C_out, H, mode).
    out2 = out2[:, :, :n_out]
    half = c_out * mode
    out_r = out2[:, :, :half].reshape(b, h, c_out, mode).transpose(0, 2, 1, 3)
    out_i = out2[:, :, half:].reshape(b, h, c_out, mode).transpose(0, 2, 1, 3)
    return jax.lax.complex(out_r, out_i)


if __name__ == "__main__":
    B, C_IN, H, W = 2, 4, 16, 16
    C_OUT, MODE = 4, 6

    key = jax.random.PRNGKey(0)
    kx, kwr, kwi = jax.random.split(key, 3)

    x = jax.random.normal(kx, (B, C_IN, H, W), dtype=jnp.float32)

    # weights1 = scale * torch.rand(in, out, mode, cfloat): uniform [0,1) re & im
    scale = 1.0 / (C_IN * C_OUT)
    w_real = scale * jax.random.uniform(kwr, (C_IN, C_OUT, MODE), dtype=jnp.float32)
    w_imag = scale * jax.random.uniform(kwi, (C_IN, C_OUT, MODE), dtype=jnp.float32)

    # Fold DFT + weights ONCE (weight-only; reused across forwards).
    m_folded = jax.block_until_ready(fold_frequency_weights(w_real, w_imag, W))

    fwd = jax.jit(functools.partial(frequency_encoder_fwd, c_out=C_OUT, mode=MODE))
    out = jax.block_until_ready(fwd(x, m_folded))

    # Pure-JAX reference (same semantics as the PyTorch module, normalize=False)
    x_ft = jnp.fft.rfft(x, norm="ortho", axis=-1)[..., :MODE]
    w_c = w_real + 1j * w_imag
    ref = jnp.einsum("bixy,ioy->boxy", x_ft, w_c,
                     precision=jax.lax.Precision.HIGHEST)

    assert out.shape == (B, C_OUT, H, MODE), out.shape
    assert out.dtype == jnp.complex64, out.dtype
    max_err = float(jnp.max(jnp.abs(out - ref)))
    assert jnp.allclose(out, ref, atol=1e-4, rtol=1e-4), max_err

    print("KERNEL_OK")
</pallas_src>

<mosaic_0001>
module attributes {stable_mosaic.version = 11 : i64} {
  func.func @_freq_kernel(%arg0: i32, %arg1: i32, %arg2: i32, %arg3: memref<1x1x16x16xf32, #tpu.memory_space<vmem>>, %arg4: memref<1x16x128xf32, #tpu.memory_space<vmem>>, %arg5: memref<1x16x128xf32, #tpu.memory_space<vmem>>, %arg6: memref<16x128xf32, #tpu.memory_space<vmem>>) attributes {dimension_semantics = [#tpu.dimension_semantics<parallel>, #tpu.dimension_semantics<parallel>, #tpu.dimension_semantics<arbitrary>], iteration_bounds = array<i64: 2, 1, 4>, scalar_prefetch = 0 : i64, scratch_operands = 1 : i64, tpu.core_type = #tpu.core_type<tc>, window_params = [{transform_indices = @transform_0, window_bounds = array<i64: 1, 1, 16, 16>}, {transform_indices = @transform_1, window_bounds = array<i64: 1, 16, 128>}, {transform_indices = @transform_2, window_bounds = array<i64: 1, 16, 128>}]} {
    %c0_i32 = arith.constant 0 : i32
    %0 = arith.cmpi eq, %arg2, %c0_i32 : i32
    %1 = arith.extui %0 : i1 to i32
    %c0_i32_0 = arith.constant 0 : i32
    %2 = arith.cmpi ne, %1, %c0_i32_0 : i32
    scf.if %2 {
      %cst_12 = arith.constant 0.000000e+00 : f32
      %14 = vector.broadcast %cst_12 : f32 to vector<16x128xf32>
      %c0_13 = arith.constant 0 : index
      %c0_14 = arith.constant 0 : index
      %15 = vector.load %arg6[%c0_13, %c0_14] : memref<16x128xf32, #tpu.memory_space<vmem>>, vector<16x128xf32>
      tpu.vector_store %arg6[%c0_13, %c0_14], %14 {strides = array<i32>} : memref<16x128xf32, #tpu.memory_space<vmem>>, vector<16x128xf32>,
    } else {
    }
    %c0 = arith.constant 0 : index
    %c0_1 = arith.constant 0 : index
    %3 = vector.load %arg6[%c0, %c0_1] : memref<16x128xf32, #tpu.memory_space<vmem>>, vector<16x128xf32>
    %c0_2 = arith.constant 0 : index
    %c0_3 = arith.constant 0 : index
    %c0_4 = arith.constant 0 : index
    %c0_5 = arith.constant 0 : index
    %4 = vector.load %arg3[%c0_2, %c0_3, %c0_4, %c0_5] : memref<1x1x16x16xf32, #tpu.memory_space<vmem>>, vector<1x1x16x16xf32>
    %5 = vector.shape_cast %4 : vector<1x1x16x16xf32> to vector<16x16xf32>
    %c0_6 = arith.constant 0 : index
    %c0_7 = arith.constant 0 : index
    %c0_8 = arith.constant 0 : index
    %6 = vector.load %arg4[%c0_6, %c0_7, %c0_8] : memref<1x16x128xf32, #tpu.memory_space<vmem>>, vector<1x16x128xf32>
    %7 = vector.shape_cast %6 : vector<1x16x128xf32> to vector<16x128xf32>
    %cst = arith.constant dense<0.000000e+00> : vector<16x128xf32>
    %8 = tpu.matmul %5, %7, %cst {dimension_numbers = #tpu.dot_dimension_numbers<[1], [0], [0], [1], [0, 0, 1, 1], [], []>, precision = #tpu.contract_precision<fp32>} : vector<16x16xf32>, vector<16x128xf32>, vector<16x128xf32> -> vector<16x128xf32>
    %9 = arith.addf %3, %8 : vector<16x128xf32>
    %c0_9 = arith.constant 0 : index
    %c0_10 = arith.constant 0 : index
    %10 = vector.load %arg6[%c0_9, %c0_10] : memref<16x128xf32, #tpu.memory_space<vmem>>, vector<16x128xf32>
    tpu.vector_store %arg6[%c0_9, %c0_10], %9 {strides = array<i32>} : memref<16x128xf32, #tpu.memory_space<vmem>>, vector<16x128xf32>,
    %c3_i32 = arith.constant 3 : i32
    %11 = arith.cmpi eq, %arg2, %c3_i32 : i32
    %12 = arith.extui %11 : i1 to i32
    %c0_i32_11 = arith.constant 0 : i32
    %13 = arith.cmpi ne, %12, %c0_i32_11 : i32
    scf.if %13 {
      %c0_12 = arith.constant 0 : index
      %c0_13 = arith.constant 0 : index
      %14 = vector.load %arg6[%c0_12, %c0_13] : memref<16x128xf32, #tpu.memory_space<vmem>>, vector<16x128xf32>
      %c0_14 = arith.constant 0 : index
      %c0_15 = arith.constant 0 : index
      %c0_16 = arith.constant 0 : index
      %15 = vector.load %arg5[%c0_14, %c0_15, %c0_16] : memref<1x16x128xf32, #tpu.memory_space<vmem>>, vector<1x16x128xf32>
      %16 = vector.shape_cast %15 : vector<1x16x128xf32> to vector<16x128xf32>
      %17 = vector.shape_cast %14 : vector<16x128xf32> to vector<1x16x128xf32>
      tpu.vector_store %arg5[%c0_14, %c0_15, %c0_16], %17 {strides = array<i32>} : memref<1x16x128xf32, #tpu.memory_space<vmem>>, vector<1x16x128xf32>,
    } else {
    }
    return
  }
  func.func @transform_0(%arg0: i32, %arg1: i32, %arg2: i32) -> (i32, i32, i32, i32) {
    %c0_i32 = arith.constant 0 : i32
    %c0_i32_0 = arith.constant 0 : i32
    return %arg0, %arg2, %arg1, %c0_i32 : i32, i32, i32, i32
  }
  func.func @transform_1(%arg0: i32, %arg1: i32, %arg2: i32) -> (i32, i32, i32) {
    %c0_i32 = arith.constant 0 : i32
    %c0_i32_0 = arith.constant 0 : i32
    %c0_i32_1 = arith.constant 0 : i32
    return %arg2, %c0_i32, %c0_i32_0 : i32, i32, i32
  }
  func.func @transform_2(%arg0: i32, %arg1: i32, %arg2: i32) -> (i32, i32, i32) {
    %c0_i32 = arith.constant 0 : i32
    %c0_i32_0 = arith.constant 0 : i32
    return %arg0, %arg1, %c0_i32 : i32, i32, i32
  }
}

</mosaic_0001>

<llo_original>
// kernel: custom-call
$region0: #{custom-call}
  %s0 = inlined_call_operand.vmem [shape: f32[2,4,16,6], index: 0, kind: input, shape index: {}]
  %s1 = inlined_call_operand.vmem [shape: f32[2,4,16,6], index: 1, kind: input, shape index: {}]
  %s2 = inlined_call_operand.vmem [shape: c64[2,4,16,6], index: 2, kind: output, shape index: {}]
  %s4 = scalar_lea.vmem %s2, 48
  %v5 = vld [vmem:[%s0] sm:$0xff]
  %6 = vst [vmem:[%s2] sm:$0xff] %v5
  %s7 = scalar_lea.vmem %s2, 8
  %s8 = scalar_lea.vmem %s0, 8
  %v9 = vld [vmem:[%s8] sm:$0xff]
  %10 = vst [vmem:[%s7] sm:$0xff] %v9
  %s11 = scalar_lea.vmem %s2, 16
  %s12 = scalar_lea.vmem %s0, 16
  %v13 = vld [vmem:[%s12] sm:$0xff]
  %14 = vst [vmem:[%s11] sm:$0xff] %v13
  %s15 = scalar_lea.vmem %s2, 24
  %s16 = scalar_lea.vmem %s0, 24
  %v17 = vld [vmem:[%s16] sm:$0xff]
  %18 = vst [vmem:[%s15] sm:$0xff] %v17
  %s19 = scalar_lea.vmem %s2, 32
  %s20 = scalar_lea.vmem %s0, 32
  %v21 = vld [vmem:[%s20] sm:$0xff]
  %22 = vst [vmem:[%s19] sm:$0xff] %v21
  %s23 = scalar_lea.vmem %s2, 40
  %s24 = scalar_lea.vmem %s0, 40
  %v25 = vld [vmem:[%s24] sm:$0xff]
  %26 = vst [vmem:[%s23] sm:$0xff] %v25
  %v27 = vld [vmem:[%s1] sm:$0xff]
  %28 = vst [vmem:[%s4] sm:$0xff] %v27
  %s29 = scalar_lea.vmem %s4, 8
  %s30 = scalar_lea.vmem %s1, 8
  %v31 = vld [vmem:[%s30] sm:$0xff]
  %32 = vst [vmem:[%s29] sm:$0xff] %v31
  %s33 = scalar_lea.vmem %s4, 16
  %s34 = scalar_lea.vmem %s1, 16
  %v35 = vld [vmem:[%s34] sm:$0xff]
  %36 = vst [vmem:[%s33] sm:$0xff] %v35
  %s37 = scalar_lea.vmem %s4, 24
  %s38 = scalar_lea.vmem %s1, 24
  %v39 = vld [vmem:[%s38] sm:$0xff]
  %40 = vst [vmem:[%s37] sm:$0xff] %v39
  %s41 = scalar_lea.vmem %s4, 32
  %s42 = scalar_lea.vmem %s1, 32
  %v43 = vld [vmem:[%s42] sm:$0xff]
  %44 = vst [vmem:[%s41] sm:$0xff] %v43
  %s45 = scalar_lea.vmem %s4, 40
  %s46 = scalar_lea.vmem %s1, 40
  %v47 = vld [vmem:[%s46] sm:$0xff]
  %48 = vst [vmem:[%s45] sm:$0xff] %v47

// kernel: frequency_encoder_fwd.1
$region0: #{frequency_encoder_fwd.1}
  #allocation0 [shape = 'u32[]', space=smem, size = 0x4, offset = 0x4, fixed_abs, tag = 'smem constant byte address 0x4 - core index']
  #allocation1 [shape = 'u32[144,128]{1,0:T(1,128)}', space=vmem, size = 0x12000, scoped, tag = 'internal scratch']
  #allocation2 [shape = 'f32[16,128]{1,0:T(8,128)}', space=vmem, size = 0x2000, scoped, tag = 'scratch operand']
  %s0 = inlined_call_operand.hbm [shape: f32[2,4,16,16], index: 0, kind: input, shape index: {}]
  %s1 = inlined_call_operand.hbm [shape: f32[4,16,128], index: 1, kind: input, shape index: {}]
  %s2 = inlined_call_operand.vmem [shape: f32[2,16,128], index: 2, kind: output, shape index: {}]
  %s3 = sld [smem:[#allocation0]]
  $region57: #{frequency_encoder_fwd.1} parent=0
    _
  %s5 = ssub.s32 1, %s3
  %s6 = scalar_select 0, %s5, %s3
  $region1: #{frequency_encoder_fwd.1} parent=0
    #allocation3 [shape = 'u8[16384]{0}', space=vmem, size = 0x4000, scoped, tag = 'input window, operand 0']
    #allocation4 [shape = 's32[2]{0}', space=sflag, size = 0x8, scoped, tag = 'scoped memory for frequency_encoder_fwd.1']
    #allocation5 [shape = 'u8[16384]{0}', space=vmem, size = 0x4000, scoped, tag = 'input window, operand 1']
    #allocation6 [shape = 's32[2]{0}', space=sflag, size = 0x8, scoped, tag = 'scoped memory for frequency_encoder_fwd.1']
    %7 = vsyncpa [#allocation4], 0
    %s8 = scalar_lea.sflag [#allocation4], 1
    %9 = vsyncpa %s8, 0
    %10 = vsyncpa [#allocation6], 0
    %s11 = scalar_lea.sflag [#allocation6], 1
    %12 = vsyncpa %s11, 0
    loop: start=0, step=1, limit=10
    $region2: #{frequency_encoder_fwd.1} parent=1 // loop_pre_header
      _
    $region3: #{frequency_encoder_fwd.1} parent=1 // loop_header
      %s14 = sphi 0, %s18
      %p15 = scmp.ge.s32.totalorder %s14, 10
      %s21 = sphi 0, %s40
      %s22 = sphi 0, %s36
      %s23 = sphi 0, %s32
      %s24 = sphi 0, %s21
      %s25 = sphi 0, %s22
      %s26 = sphi 0, %s23
      %s27 = sphi 0, %s24
      %s28 = sphi 0, %s25
      %s29 = sphi 0, %s26
      %s47 = sphi 0, %s49
      %s50 = sphi 0, %s47
      %s51 = sphi 0, %s50
      %s67 = sphi 0, %s51
      %s73 = sphi 0, %s75
      %s76 = sphi 0, %s73
      %s77 = sphi 0, %s76
      %s93 = sphi 0, %s77
      %s101 = sphi 0, %s103
      %s104 = sphi 0, %s101
      %s105 = sphi 0, %s104
      %s121 = sphi 0, %s105
    $region4: #{frequency_encoder_fwd.1} parent=1 // loop_header_branch
      %17 = sbr.rel (%p15) target = $region8
    $region5: #{frequency_encoder_fwd.1} parent=1 // loop_body
      %s19 = ssub.s32 %s14, 1
      %s20 = ssub.s32 %s14, 2
      %s30 = sadd.s32 1, %s23
      %p31 = scmp.ge.s32.totalorder %s30, 4
      %s32 = scalar_select %p31, 0, %s30
      %s33 = sadd.s32 1, %s22
      %s34 = scalar_select %p31, %s33, %s22
      %p35 = scmp.ge.s32.totalorder %s34, 1
      %s36 = scalar_select %p35, 0, %s34
      %s37 = sadd.s32 1, %s21
      %s38 = scalar_select %p35, %s37, %s21
      %p39 = scmp.ge.s32.totalorder %s38, 2
      %s40 = scalar_select %p39, 0, %s38
      %s41 = ssub.s32 %s21, %s40
      %s42 = ssub.s32 %s23, %s32
      %s43 = sor.u32 %s41, %s42
      %s44 = ssub.s32 %s22, %s36
      %s45 = sor.u32 %s43, %s44
      %p46 = scmp.eq.s32.totalorder %s45, 0
      %s48 = sadd.s32 %s47, 1
      %s49 = scalar_select %p46, %s47, %s48
      %p52 = pneg %p46
      %p53 = scmp.eq.s32.totalorder %s14, 7
      %p54 = por %p52, %p53
      %p55 = scmp.ne.s32.totalorder %s47, %s50
      %p56 = scmp.eq.s32.totalorder %s14, 0
      %p57 = por %p55, %p56
      %p58 = scmp.ne.s32.totalorder %s47, %s50
      %p59 = scmp.eq.s32.totalorder %s19, 7
      %p60 = por %p58, %p59
      %p61 = scmp.ne.s32.totalorder %s50, %s51
      %p62 = scmp.eq.s32.totalorder %s19, 0
      %p63 = por %p61, %p62
      %p64 = scmp.ne.s32.totalorder %s50, %s51
      %p65 = scmp.eq.s32.totalorder %s20, 7
      %p66 = por %p64, %p65
      %p68 = scmp.ne.s32.totalorder %s51, %s67
      %p69 = scmp.eq.s32.totalorder %s20, 0
      %p70 = por %p68, %p69
      %s71 = ssub.s32 %s23, %s32
      %p72 = scmp.eq.s32.totalorder %s71, 0
      %s74 = sadd.s32 %s73, 1
      %s75 = scalar_select %p72, %s73, %s74
      %p78 = pneg %p72
      %p79 = scmp.eq.s32.totalorder %s14, 7
      %p80 = por %p78, %p79
      %p81 = scmp.ne.s32.totalorder %s73, %s76
      %p82 = scmp.eq.s32.totalorder %s14, 0
      %p83 = por %p81, %p82
      %p84 = scmp.ne.s32.totalorder %s73, %s76
      %p85 = scmp.eq.s32.totalorder %s19, 7
      %p86 = por %p84, %p85
      %p87 = scmp.ne.s32.totalorder %s76, %s77
      %p88 = scmp.eq.s32.totalorder %s19, 0
      %p89 = por %p87, %p88
      %p90 = scmp.ne.s32.totalorder %s76, %s77
      %p91 = scmp.eq.s32.totalorder %s20, 7
      %p92 = por %p90, %p91
      %p94 = scmp.ne.s32.totalorder %s77, %s93
      %p95 = scmp.eq.s32.totalorder %s20, 0
      %p96 = por %p94, %p95
      %s97 = ssub.s32 %s21, %s40
      %s98 = ssub.s32 %s22, %s36
      %s99 = sor.u32 %s97, %s98
      %p100 = scmp.eq.s32.totalorder %s99, 0
      %s102 = sadd.s32 %s101, 1
      %s103 = scalar_select %p100, %s101, %s102
      %p106 = pneg %p100
      %p107 = scmp.eq.s32.totalorder %s14, 7
      %p108 = por %p106, %p107
      %p109 = scmp.ne.s32.totalorder %s101, %s104
      %p110 = scmp.eq.s32.totalorder %s14, 0
      %p111 = por %p109, %p110
      %p112 = scmp.ne.s32.totalorder %s101, %s104
      %p113 = scmp.eq.s32.totalorder %s19, 7
      %p114 = por %p112, %p113
      %p115 = scmp.ne.s32.totalorder %s104, %s105
      %p116 = scmp.eq.s32.totalorder %s19, 0
      %p117 = por %p115, %p116
      %p118 = scmp.ne.s32.totalorder %s104, %s105
      %p119 = scmp.eq.s32.totalorder %s20, 7
      %p120 = por %p118, %p119
      %p122 = scmp.ne.s32.totalorder %s105, %s121
      %p123 = scmp.eq.s32.totalorder %s20, 0
      %p124 = por %p122, %p123
      %p125 = scmp.le.s32.totalorder 1, %s14
      %p126 = scmp.lt.s32.totalorder %s14, 9
      %p127 = pnand %p125, %p126
      %p128 = pneg %p127
      // Predicated region
      $region9: #{frequency_encoder_fwd.1} parent=5 // pred_check
        _
      $region10: #{frequency_encoder_fwd.1} parent=5 // pred_check_branch
        %130 = sbr.rel (%p127) target = $region12
      $region11: #{frequency_encoder_fwd.1} parent=5 // pred_region
        %s131 = ssub.s32 %s14, 1
      $region12: #{frequency_encoder_fwd.1} parent=5 // pred_fallthru
        _
      %p132 = scmp.lt.s32.totalorder %s14, 8
      // Predicated region
      $region13: #{frequency_encoder_fwd.1} parent=5 // pred_check
        %p133 = pneg %p132
      $region14: #{frequency_encoder_fwd.1} parent=5 // pred_check_branch
        %135 = sbr.rel (%p133) target = $region16
      $region15: #{frequency_encoder_fwd.1} parent=5 // pred_region
        // Predicated region
        $region17: #{frequency_encoder_fwd.1} parent=15 // pred_check
          %p136 = pneg %p57
        $region18: #{frequency_encoder_fwd.1} parent=15 // pred_check_branch
          %138 = sbr.rel (%p136) target = $region20
        $region19: #{frequency_encoder_fwd.1} parent=15 // pred_region
          %s139 = sand.u32 %s47, 1
          %s140 = scalar_lea.sflag [#allocation4], %s139
          %s141 = sand.u32 %s47, 1
          %s142 = smul.addr %s141, 16
          %s143 = scalar_lea.vmem [#allocation3], %s142
          %s144 = smul.u32 2, %s22
          %s146 = ssub.s32 256, 256
          %147 = vsyncadd %s140, %s146
          %s148 = smul.addr %s23, 2
          %s149 = sadd.s32 %s144, %s148
          %s150 = smul.addr %s21, 8
          %s151 = sadd.s32 %s149, %s150
          %s152 = smul.addr %s151, 128
          %s153 = scalar_lea.hbm %s0, %s152
          %s154 = sshll.u32 %s143, 4
          %s155 = int_to_ptr.vmem [resolvable:$true] %s154
          %160 = dma.hbm_to_vmem [thread:$0]  %s153, 256, %s155, %s140, 128, 128, 8
        $region20: #{frequency_encoder_fwd.1} parent=15 // pred_fallthru
          _
        // Predicated region
        $region21: #{frequency_encoder_fwd.1} parent=15 // pred_check
          %p161 = pneg %p83
        $region22: #{frequency_encoder_fwd.1} parent=15 // pred_check_branch
          %163 = sbr.rel (%p161) target = $region24
        $region23: #{frequency_encoder_fwd.1} parent=15 // pred_region
          %s164 = sand.u32 %s73, 1
          %s165 = scalar_lea.sflag [#allocation6], %s164
          %s166 = sand.u32 %s73, 1
          %s167 = smul.addr %s166, 16
          %s168 = scalar_lea.vmem [#allocation5], %s167
          %s170 = ssub.s32 256, 256
          %171 = vsyncadd %s165, %s170
          %s172 = smul.addr %s23, 2
          %s173 = smul.addr %s172, 128
          %s174 = scalar_lea.hbm %s1, %s173
          %s175 = sshll.u32 %s168, 4
          %s176 = int_to_ptr.vmem [resolvable:$true] %s175
          %181 = dma.hbm_to_vmem [thread:$0]  %s174, 256, %s176, %s165, 128, 128, 8
        $region24: #{frequency_encoder_fwd.1} parent=15 // pred_fallthru
          _
      $region16: #{frequency_encoder_fwd.1} parent=5 // pred_fallthru
        _
      %p182 = scmp.le.s32.totalorder 1, %s14
      %p183 = scmp.lt.s32.totalorder %s14, 9
      %p184 = pnand %p182, %p183
      %p185 = pneg %p184
      // Predicated region
      $region25: #{frequency_encoder_fwd.1} parent=5 // pred_check
        _
      $region26: #{frequency_encoder_fwd.1} parent=5 // pred_check_branch
        %187 = sbr.rel (%p184) target = $region28
      $region27: #{frequency_encoder_fwd.1} parent=5 // pred_region
        %s188 = ssub.s32 %s14, 1
        %s189 = sand.u32 %s50, 1
        %s190 = scalar_lea.sflag [#allocation4], %s189
        %s191 = sand.u32 %s50, 1
        %s192 = smul.addr %s191, 16
        %s193 = scalar_lea.vmem [#allocation3], %s192
        // Predicated region
        $region29: #{frequency_encoder_fwd.1} parent=27 // pred_check
          %p194 = pneg %p63
        $region30: #{frequency_encoder_fwd.1} parent=27 // pred_check_branch
          %196 = sbr.rel (%p194) target = $region32
        $region31: #{frequency_encoder_fwd.1} parent=27 // pred_region
          %197 = dma.done %s190, 256
        $region32: #{frequency_encoder_fwd.1} parent=27 // pred_fallthru
          _
        %s198 = sand.u32 %s76, 1
        %s199 = scalar_lea.sflag [#allocation6], %s198
        %s200 = sand.u32 %s76, 1
        %s201 = smul.addr %s200, 16
        %s202 = scalar_lea.vmem [#allocation5], %s201
        // Predicated region
        $region33: #{frequency_encoder_fwd.1} parent=27 // pred_check
          %p203 = pneg %p89
        $region34: #{frequency_encoder_fwd.1} parent=27 // pred_check_branch
          %205 = sbr.rel (%p203) target = $region36
        $region35: #{frequency_encoder_fwd.1} parent=27 // pred_region
          %206 = dma.done %s199, 256
        $region36: #{frequency_encoder_fwd.1} parent=27 // pred_fallthru
          _
        %s207 = sand.u32 %s50, 1
        %s208 = scalar_lea.sflag [#allocation4], %s207
        %s209 = sand.u32 %s50, 1
        %s210 = smul.addr %s209, 16
        %s211 = scalar_lea.vmem [#allocation3], %s210
        %p212 = pneg %p63
        %p213 = pneg %p60
        %s214 = sand.u32 %s76, 1
        %s215 = scalar_lea.sflag [#allocation6], %s214
        %s216 = sand.u32 %s76, 1
        %s217 = smul.addr %s216, 16
        %s218 = scalar_lea.vmem [#allocation5], %s217
        %p219 = pneg %p89
        %p220 = pneg %p86
        %p221 = pneg %p117
        %p222 = pneg %p114
        %s223 = smul.u32 2, %s25
        %p224 = scmp.lt.s32.totalorder %s24, 1
        %s225 = scalar_select %p224, %s24, 1
        %p226 = scmp.lt.s32.totalorder %s223, 1
        %s227 = scalar_select %p226, %s223, 1
        %s228 = smul.addr %s225, 2
        %s229 = sadd.s32 %s227, %s228
        %s230 = smul.addr %s229, 8
        %s231 = scalar_lea.vmem %s2, %s230
        %s232 = smul.u32 2, %s25
        %s233 = smul.u32 2, %s25
        %p234 = scmp.lt.s32.totalorder %s24, 1
        %s235 = scalar_select %p234, %s24, 1
        %p236 = scmp.lt.s32.totalorder %s233, 1
        %s237 = scalar_select %p236, %s233, 1
        %s238 = smul.addr %s235, 2
        %s239 = sadd.s32 %s237, %s238
        %s240 = smul.addr %s239, 8
        %s241 = scalar_lea.vmem %s2, %s240
        %s242 = smul.u32 2, %s25
        %p243 = scmp.eq.s32.totalorder %s26, 0
        // Predicated region
        $region37: #{frequency_encoder_fwd.1} parent=27 // pred_check
          %p244 = pneg %p243
        $region38: #{frequency_encoder_fwd.1} parent=27 // pred_check_branch
          %246 = sbr.rel (%p244) target = $region40
        $region39: #{frequency_encoder_fwd.1} parent=27 // pred_region
          %247 = vst [vmem:[#allocation2] sm:$0xff] 0.0
          %248 = vst [vmem:[#allocation2 + $0x8] sm:$0xff] 0.0
        $region40: #{frequency_encoder_fwd.1} parent=27 // pred_fallthru
          _
        %v249 = vld [vmem:[#allocation2] sm:$0xff]
        %v250 = vld [vmem:[#allocation2 + $0x8] sm:$0xff]
        %v251 = vld [vmem:[%s193] sm:$0xff]
        %v252 = vld [vmem:[%s193 + $0x8] sm:$0xff]
        %v253 = vld [vmem:[%s202] sm:$0xff]
        %v254 = vld [vmem:[%s202 + $0x8] sm:$0xff]
        %vm255 = vcmask 130048
        %v257 = vsel %vm255, %v251, 0
        %v260 = vsel %vm255, %v252, 0
        %262 = vmatprep.subr.mxu0 0.0
        %263 = vmatpush1.msra.mxu0 0.0
        %264 = vmatprep.subr.mxu0 0.0
        %265 = vmatpush1.msra.mxu0 0.0
        %266 = vmatprep.subr.mxu0 0.0
        %267 = vmatpush1.msra.mxu0 0.0
        %268 = vmatprep.subr.mxu0 0.0
        %269 = vmatpush1.msra.mxu0 0.0
        %270 = vmatprep.subr.mxu0 0.0
        %271 = vmatpush1.msra.mxu0 0.0
        %272 = vmatprep.subr.mxu0 0.0
        %273 = vmatpush1.msra.mxu0 0.0
        %274 = vmatprep.subr.mxu0 0.0
        %275 = vmatpush1.msra.mxu0 0.0
        %276 = vmatprep.subr.mxu0 0.0
        %277 = vmatpush1.msra.mxu0 0.0
        %278 = vmatprep.subr.mxu0 0.0
        %279 = vmatpush1.msra.mxu0 0.0
        %280 = vmatprep.subr.mxu0 0.0
        %281 = vmatpush1.msra.mxu0 0.0
        %282 = vmatprep.subr.mxu0 0.0
        %283 = vmatpush1.msra.mxu0 0.0
        %284 = vmatprep.subr.mxu0 0.0
        %285 = vmatpush1.msra.mxu0 0.0
        %286 = vmatprep.subr.mxu0 0.0
        %287 = vmatpush1.msra.mxu0 0.0
        %288 = vmatprep.subr.mxu0 0.0
        %289 = vmatpush1.msra.mxu0 0.0
        %290 = vmatprep.subr.mxu0 0.0
        %v291 = vand.u32 %v254, 4294901760
        %292 = vmatpush1.msra.mxu0 %v291
        %293 = vmatprep.subr.mxu0 0.0
        %v294 = vand.u32 %v253, 4294901760
        %295 = vmatpush1.msra.mxu0 %v294
        %296 = vmatprep.subr.mxu0 0.0
        %297 = vmatpush2.msra.mxu0 0.0
        %298 = vmatprep.subr.mxu0 0.0
        %299 = vmatpush2.msra.mxu0 0.0
        %300 = vmatprep.subr.mxu0 0.0
        %301 = vmatpush2.msra.mxu0 0.0
        %302 = vmatprep.subr.mxu0 0.0
        %303 = vmatpush2.msra.mxu0 0.0
        %304 = vmatprep.subr.mxu0 0.0
        %305 = vmatpush2.msra.mxu0 0.0
        %306 = vmatprep.subr.mxu0 0.0
        %307 = vmatpush2.msra.mxu0 0.0
        %308 = vmatprep.subr.mxu0 0.0
        %309 = vmatpush2.msra.mxu0 0.0
        %310 = vmatprep.subr.mxu0 0.0
        %311 = vmatpush2.msra.mxu0 0.0
        %312 = vmatprep.subr.mxu0 0.0
        %313 = vmatpush2.msra.mxu0 0.0
        %314 = vmatprep.subr.mxu0 0.0
        %315 = vmatpush2.msra.mxu0 0.0
        %316 = vmatprep.subr.mxu0 0.0
        %317 = vmatpush2.msra.mxu0 0.0
        %318 = vmatprep.subr.mxu0 0.0
        %319 = vmatpush2.msra.mxu0 0.0
        %320 = vmatprep.subr.mxu0 0.0
        %321 = vmatpush2.msra.mxu0 0.0
        %322 = vmatprep.subr.mxu0 0.0
        %323 = vmatpush2.msra.mxu0 0.0
        %324 = vmatprep.subr.mxu0 0.0
        %325 = vmatpush2.msra.mxu0 0.0
        %326 = vmatprep.subr.mxu0 0.0
        %327 = vmatpush2.msra.mxu0 0.0
        %328 = vmatprep.mubr.f32.mxu0 0.0
        %v329 = vand.u32 %v257, 4294901760
        %v330 = vsub.f32 %v257, %v329
        %v331 = vand.u32 %v330, 4294901760
        %v332 = vsub.f32 %v330, %v331
        %v333 = vand.u32 %v332, 4294901760
        %334 = vmatmul.mubr.f32.gmra.mxu0 %v333
        %v335 = vpop.f32.mrf.mxu0
        %v336 = vadd.f32 0.0, %v335
        %v337 = vpop.f32.mrf.mxu0
        %338 = vmatprep.mubr.f32.mxu0 0.0
        %v339 = vand.u32 %v260, 4294901760
        %v340 = vsub.f32 %v260, %v339
        %v341 = vand.u32 %v340, 4294901760
        %v342 = vsub.f32 %v340, %v341
        %v343 = vand.u32 %v342, 4294901760
        %344 = vmatmul.mubr.f32.gmra.mxu0 %v343
        %v345 = vpop.f32.mrf.mxu0
        %v346 = vadd.f32 0.0, %v345
        %v347 = vpop.f32.mrf.mxu0
        %348 = vdwg.mxu0
        %349 = vmatprep.subr.mxu0 0.0
        %350 = vmatpush1.msra.mxu0 0.0
        %351 = vmatprep.subr.mxu0 0.0
        %352 = vmatpush1.msra.mxu0 0.0
        %353 = vmatprep.subr.mxu0 0.0
        %354 = vmatpush1.msra.mxu0 0.0
        %355 = vmatprep.subr.mxu0 0.0
        %356 = vmatpush1.msra.mxu0 0.0
        %357 = vmatprep.subr.mxu0 0.0
        %358 = vmatpush1.msra.mxu0 0.0
        %359 = vmatprep.subr.mxu0 0.0
        %360 = vmatpush1.msra.mxu0 0.0
        %361 = vmatprep.subr.mxu0 0.0
        %362 = vmatpush1.msra.mxu0 0.0
        %363 = vmatprep.subr.mxu0 0.0
        %364 = vmatpush1.msra.mxu0 0.0
        %365 = vmatprep.subr.mxu0 0.0
        %366 = vmatpush1.msra.mxu0 0.0
        %367 = vmatprep.subr.mxu0 0.0
        %368 = vmatpush1.msra.mxu0 0.0
        %369 = vmatprep.subr.mxu0 0.0
        %370 = vmatpush1.msra.mxu0 0.0
        %371 = vmatprep.subr.mxu0 0.0
        %372 = vmatpush1.msra.mxu0 0.0
        %373 = vmatprep.subr.mxu0 0.0
        %374 = vmatpush1.msra.mxu0 0.0
        %375 = vmatprep.subr.mxu0 0.0
        %376 = vmatpush1.msra.mxu0 0.0
        %377 = vmatprep.subr.mxu0 0.0
        %v378 = vand.u32 %v254, 4294901760
        %v379 = vsub.f32 %v254, %v378
        %v380 = vand.u32 %v379, 4294901760
        %v381 = vsub.f32 %v379, %v380
        %v382 = vand.u32 %v381, 4294901760
        %383 = vmatpush1.msra.mxu0 %v382
        %384 = vmatprep.subr.mxu0 0.0
        %v385 = vand.u32 %v253, 4294901760
        %v386 = vsub.f32 %v253, %v385
        %v387 = vand.u32 %v386, 4294901760
        %v388 = vsub.f32 %v386, %v387
        %v389 = vand.u32 %v388, 4294901760
        %390 = vmatpush1.msra.mxu0 %v389
        %391 = vmatprep.subr.mxu0 0.0
        %392 = vmatpush2.msra.mxu0 0.0
        %393 = vmatprep.subr.mxu0 0.0
        %394 = vmatpush2.msra.mxu0 0.0
        %395 = vmatprep.subr.mxu0 0.0
        %396 = vmatpush2.msra.mxu0 0.0
        %397 = vmatprep.subr.mxu0 0.0
        %398 = vmatpush2.msra.mxu0 0.0
        %399 = vmatprep.subr.mxu0 0.0
        %400 = vmatpush2.msra.mxu0 0.0
        %401 = vmatprep.subr.mxu0 0.0
        %402 = vmatpush2.msra.mxu0 0.0
        %403 = vmatprep.subr.mxu0 0.0
        %404 = vmatpush2.msra.mxu0 0.0
        %405 = vmatprep.subr.mxu0 0.0
        %406 = vmatpush2.msra.mxu0 0.0
        %407 = vmatprep.subr.mxu0 0.0
        %408 = vmatpush2.msra.mxu0 0.0
        %409 = vmatprep.subr.mxu0 0.0
        %410 = vmatpush2.msra.mxu0 0.0
        %411 = vmatprep.subr.mxu0 0.0
        %412 = vmatpush2.msra.mxu0 0.0
        %413 = vmatprep.subr.mxu0 0.0
        %414 = vmatpush2.msra.mxu0 0.0
        %415 = vmatprep.subr.mxu0 0.0
        %416 = vmatpush2.msra.mxu0 0.0
        %417 = vmatprep.subr.mxu0 0.0
        %418 = vmatpush2.msra.mxu0 0.0
        %419 = vmatprep.subr.mxu0 0.0
        %420 = vmatpush2.msra.mxu0 0.0
        %421 = vmatprep.subr.mxu0 0.0
        %422 = vmatpush2.msra.mxu0 0.0
        %423 = vmatprep.mubr.f32.mxu0 0.0
        %v424 = vand.u32 %v257, 4294901760
        %425 = vmatmul.mubr.f32.gmra.mxu0 %v424
        %v426 = vpop.f32.mrf.mxu0
        %v427 = vadd.f32 %v336, %v426
        %v428 = vpop.f32.mrf.mxu0
        %429 = vmatprep.mubr.f32.mxu0 0.0
        %v430 = vand.u32 %v260, 4294901760
        %431 = vmatmul.mubr.f32.gmra.mxu0 %v430
        %v432 = vpop.f32.mrf.mxu0
        %v433 = vadd.f32 %v346, %v432
        %v434 = vpop.f32.mrf.mxu0
        %435 = vdwg.mxu0
        %436 = vmatprep.subr.mxu0 0.0
        %437 = vmatpush1.msra.mxu0 0.0
        %438 = vmatprep.subr.mxu0 0.0
        %439 = vmatpush1.msra.mxu0 0.0
        %440 = vmatprep.subr.mxu0 0.0
        %441 = vmatpush1.msra.mxu0 0.0
        %442 = vmatprep.subr.mxu0 0.0
        %443 = vmatpush1.msra.mxu0 0.0
        %444 = vmatprep.subr.mxu0 0.0
        %445 = vmatpush1.msra.mxu0 0.0
        %446 = vmatprep.subr.mxu0 0.0
        %447 = vmatpush1.msra.mxu0 0.0
        %448 = vmatprep.subr.mxu0 0.0
        %449 = vmatpush1.msra.mxu0 0.0
        %450 = vmatprep.subr.mxu0 0.0
        %451 = vmatpush1.msra.mxu0 0.0
        %452 = vmatprep.subr.mxu0 0.0
        %453 = vmatpush1.msra.mxu0 0.0
        %454 = vmatprep.subr.mxu0 0.0
        %455 = vmatpush1.msra.mxu0 0.0
        %456 = vmatprep.subr.mxu0 0.0
        %457 = vmatpush1.msra.mxu0 0.0
        %458 = vmatprep.subr.mxu0 0.0
        %459 = vmatpush1.msra.mxu0 0.0
        %460 = vmatprep.subr.mxu0 0.0
        %461 = vmatpush1.msra.mxu0 0.0
        %462 = vmatprep.subr.mxu0 0.0
        %463 = vmatpush1.msra.mxu0 0.0
        %464 = vmatprep.subr.mxu0 0.0
        %v465 = vand.u32 %v254, 4294901760
        %v466 = vsub.f32 %v254, %v465
        %467 = vmatpush1.msra.mxu0 %v466
        %468 = vmatprep.subr.mxu0 0.0
        %v469 = vand.u32 %v253, 4294901760
        %v470 = vsub.f32 %v253, %v469
        %471 = vmatpush1.msra.mxu0 %v470
        %472 = vmatprep.subr.mxu0 0.0
        %473 = vmatpush2.msra.mxu0 0.0
        %474 = vmatprep.subr.mxu0 0.0
        %475 = vmatpush2.msra.mxu0 0.0
        %476 = vmatprep.subr.mxu0 0.0
        %477 = vmatpush2.msra.mxu0 0.0
        %478 = vmatprep.subr.mxu0 0.0
        %479 = vmatpush2.msra.mxu0 0.0
        %480 = vmatprep.subr.mxu0 0.0
        %481 = vmatpush2.msra.mxu0 0.0
        %482 = vmatprep.subr.mxu0 0.0
        %483 = vmatpush2.msra.mxu0 0.0
        %484 = vmatprep.subr.mxu0 0.0
        %485 = vmatpush2.msra.mxu0 0.0
        %486 = vmatprep.subr.mxu0 0.0
        %487 = vmatpush2.msra.mxu0 0.0
        %488 = vmatprep.subr.mxu0 0.0
        %489 = vmatpush2.msra.mxu0 0.0
        %490 = vmatprep.subr.mxu0 0.0
        %491 = vmatpush2.msra.mxu0 0.0
        %492 = vmatprep.subr.mxu0 0.0
        %493 = vmatpush2.msra.mxu0 0.0
        %494 = vmatprep.subr.mxu0 0.0
        %495 = vmatpush2.msra.mxu0 0.0
        %496 = vmatprep.subr.mxu0 0.0
        %497 = vmatpush2.msra.mxu0 0.0
        %498 = vmatprep.subr.mxu0 0.0
        %499 = vmatpush2.msra.mxu0 0.0
        %500 = vmatprep.subr.mxu0 0.0
        %501 = vmatpush2.msra.mxu0 0.0
        %502 = vmatprep.subr.mxu0 0.0
        %503 = vmatpush2.msra.mxu0 0.0
        %504 = vmatprep.mubr.f32.mxu0 0.0
        %v505 = vand.u32 %v257, 4294901760
        %v506 = vsub.f32 %v257, %v505
        %507 = vmatmul.mubr.f32.gmra.mxu0 %v506
        %v508 = vpop.f32.mrf.mxu0
        %v509 = vadd.f32 %v427, %v508
        %v510 = vpop.f32.mrf.mxu0
        %511 = vmatprep.mubr.f32.mxu0 0.0
        %v512 = vand.u32 %v260, 4294901760
        %v513 = vsub.f32 %v260, %v512
        %514 = vmatmul.mubr.f32.gmra.mxu0 %v513
        %v515 = vpop.f32.mrf.mxu0
        %v516 = vadd.f32 %v433, %v515
        %v517 = vpop.f32.mrf.mxu0
        %518 = vdwg.mxu0
        %519 = vmatprep.subr.mxu0 0.0
        %520 = vmatpush1.msra.mxu0 0.0
        %521 = vmatprep.subr.mxu0 0.0
        %522 = vmatpush1.msra.mxu0 0.0
        %523 = vmatprep.subr.mxu0 0.0
        %524 = vmatpush1.msra.mxu0 0.0
        %525 = vmatprep.subr.mxu0 0.0
        %526 = vmatpush1.msra.mxu0 0.0
        %527 = vmatprep.subr.mxu0 0.0
        %528 = vmatpush1.msra.mxu0 0.0
        %529 = vmatprep.subr.mxu0 0.0
        %530 = vmatpush1.msra.mxu0 0.0
        %531 = vmatprep.subr.mxu0 0.0
        %532 = vmatpush1.msra.mxu0 0.0
        %533 = vmatprep.subr.mxu0 0.0
        %534 = vmatpush1.msra.mxu0 0.0
        %535 = vmatprep.subr.mxu0 0.0
        %536 = vmatpush1.msra.mxu0 0.0
        %537 = vmatprep.subr.mxu0 0.0
        %538 = vmatpush1.msra.mxu0 0.0
        %539 = vmatprep.subr.mxu0 0.0
        %540 = vmatpush1.msra.mxu0 0.0
        %541 = vmatprep.subr.mxu0 0.0
        %542 = vmatpush1.msra.mxu0 0.0
        %543 = vmatprep.subr.mxu0 0.0
        %544 = vmatpush1.msra.mxu0 0.0
        %545 = vmatprep.subr.mxu0 0.0
        %546 = vmatpush1.msra.mxu0 0.0
        %547 = vmatprep.subr.mxu0 0.0
        %v548 = vand.u32 %v254, 4294901760
        %549 = vmatpush1.msra.mxu0 %v548
        %550 = vmatprep.subr.mxu0 0.0
        %v551 = vand.u32 %v253, 4294901760
        %552 = vmatpush1.msra.mxu0 %v551
        %553 = vmatprep.subr.mxu0 0.0
        %554 = vmatpush2.msra.mxu0 0.0
        %555 = vmatprep.subr.mxu0 0.0
        %556 = vmatpush2.msra.mxu0 0.0
        %557 = vmatprep.subr.mxu0 0.0
        %558 = vmatpush2.msra.mxu0 0.0
        %559 = vmatprep.subr.mxu0 0.0
        %560 = vmatpush2.msra.mxu0 0.0
        %561 = vmatprep.subr.mxu0 0.0
        %562 = vmatpush2.msra.mxu0 0.0
        %563 = vmatprep.subr.mxu0 0.0
        %564 = vmatpush2.msra.mxu0 0.0
        %565 = vmatprep.subr.mxu0 0.0
        %566 = vmatpush2.msra.mxu0 0.0
        %567 = vmatprep.subr.mxu0 0.0
        %568 = vmatpush2.msra.mxu0 0.0
        %569 = vmatprep.subr.mxu0 0.0
        %570 = vmatpush2.msra.mxu0 0.0
        %571 = vmatprep.subr.mxu0 0.0
        %572 = vmatpush2.msra.mxu0 0.0
        %573 = vmatprep.subr.mxu0 0.0
        %574 = vmatpush2.msra.mxu0 0.0
        %575 = vmatprep.subr.mxu0 0.0
        %576 = vmatpush2.msra.mxu0 0.0
        %577 = vmatprep.subr.mxu0 0.0
        %578 = vmatpush2.msra.mxu0 0.0
        %579 = vmatprep.subr.mxu0 0.0
        %580 = vmatpush2.msra.mxu0 0.0
        %581 = vmatprep.subr.mxu0 0.0
        %582 = vmatpush2.msra.mxu0 0.0
        %583 = vmatprep.subr.mxu0 0.0
        %584 = vmatpush2.msra.mxu0 0.0
        %585 = vmatprep.mubr.f32.mxu0 0.0
        %v586 = vand.u32 %v257, 4294901760
        %v587 = vsub.f32 %v257, %v586
        %v588 = vand.u32 %v587, 4294901760
        %589 = vmatmul.mubr.f32.gmra.mxu0 %v588
        %v590 = vpop.f32.mrf.mxu0
        %v591 = vadd.f32 %v509, %v590
        %v592 = vpop.f32.mrf.mxu0
        %593 = vmatprep.mubr.f32.mxu0 0.0
        %v594 = vand.u32 %v260, 4294901760
        %v595 = vsub.f32 %v260, %v594
        %v596 = vand.u32 %v595, 4294901760
        %597 = vmatmul.mubr.f32.gmra.mxu0 %v596
        %v598 = vpop.f32.mrf.mxu0
        %v599 = vadd.f32 %v516, %v598
        %v600 = vpop.f32.mrf.mxu0
        %601 = vdwg.mxu0
        %602 = vmatprep.subr.mxu0 0.0
        %603 = vmatpush1.msra.mxu0 0.0
        %604 = vmatprep.subr.mxu0 0.0
        %605 = vmatpush1.msra.mxu0 0.0
        %606 = vmatprep.subr.mxu0 0.0
        %607 = vmatpush1.msra.mxu0 0.0
        %608 = vmatprep.subr.mxu0 0.0
        %609 = vmatpush1.msra.mxu0 0.0
        %610 = vmatprep.subr.mxu0 0.0
        %611 = vmatpush1.msra.mxu0 0.0
        %612 = vmatprep.subr.mxu0 0.0
        %613 = vmatpush1.msra.mxu0 0.0
        %614 = vmatprep.subr.mxu0 0.0
        %615 = vmatpush1.msra.mxu0 0.0
        %616 = vmatprep.subr.mxu0 0.0
        %617 = vmatpush1.msra.mxu0 0.0
        %618 = vmatprep.subr.mxu0 0.0
        %619 = vmatpush1.msra.mxu0 0.0
        %620 = vmatprep.subr.mxu0 0.0
        %621 = vmatpush1.msra.mxu0 0.0
        %622 = vmatprep.subr.mxu0 0.0
        %623 = vmatpush1.msra.mxu0 0.0
        %624 = vmatprep.subr.mxu0 0.0
        %625 = vmatpush1.msra.mxu0 0.0
        %626 = vmatprep.subr.mxu0 0.0
        %627 = vmatpush1.msra.mxu0 0.0
        %628 = vmatprep.subr.mxu0 0.0
        %629 = vmatpush1.msra.mxu0 0.0
        %630 = vmatprep.subr.mxu0 0.0
        %v631 = vand.u32 %v254, 4294901760
        %v632 = vsub.f32 %v254, %v631
        %v633 = vand.u32 %v632, 4294901760
        %634 = vmatpush1.msra.mxu0 %v633
        %635 = vmatprep.subr.mxu0 0.0
        %v636 = vand.u32 %v253, 4294901760
        %v637 = vsub.f32 %v253, %v636
        %v638 = vand.u32 %v637, 4294901760
        %639 = vmatpush1.msra.mxu0 %v638
        %640 = vmatprep.subr.mxu0 0.0
        %641 = vmatpush2.msra.mxu0 0.0
        %642 = vmatprep.subr.mxu0 0.0
        %643 = vmatpush2.msra.mxu0 0.0
        %644 = vmatprep.subr.mxu0 0.0
        %645 = vmatpush2.msra.mxu0 0.0
        %646 = vmatprep.subr.mxu0 0.0
        %647 = vmatpush2.msra.mxu0 0.0
        %648 = vmatprep.subr.mxu0 0.0
        %649 = vmatpush2.msra.mxu0 0.0
        %650 = vmatprep.subr.mxu0 0.0
        %651 = vmatpush2.msra.mxu0 0.0
        %652 = vmatprep.subr.mxu0 0.0
        %653 = vmatpush2.msra.mxu0 0.0
        %654 = vmatprep.subr.mxu0 0.0
        %655 = vmatpush2.msra.mxu0 0.0
        %656 = vmatprep.subr.mxu0 0.0
        %657 = vmatpush2.msra.mxu0 0.0
        %658 = vmatprep.subr.mxu0 0.0
        %659 = vmatpush2.msra.mxu0 0.0
        %660 = vmatprep.subr.mxu0 0.0
        %661 = vmatpush2.msra.mxu0 0.0
        %662 = vmatprep.subr.mxu0 0.0
        %663 = vmatpush2.msra.mxu0 0.0
        %664 = vmatprep.subr.mxu0 0.0
        %665 = vmatpush2.msra.mxu0 0.0
        %666 = vmatprep.subr.mxu0 0.0
        %667 = vmatpush2.msra.mxu0 0.0
        %668 = vmatprep.subr.mxu0 0.0
        %669 = vmatpush2.msra.mxu0 0.0
        %670 = vmatprep.subr.mxu0 0.0
        %671 = vmatpush2.msra.mxu0 0.0
        %672 = vmatprep.mubr.f32.mxu0 0.0
        %v673 = vand.u32 %v257, 4294901760
        %674 = vmatmul.mubr.f32.gmra.mxu0 %v673
        %v675 = vpop.f32.mrf.mxu0
        %v676 = vadd.f32 %v591, %v675
        %v677 = vpop.f32.mrf.mxu0
        %678 = vmatprep.mubr.f32.mxu0 0.0
        %v679 = vand.u32 %v260, 4294901760
        %680 = vmatmul.mubr.f32.gmra.mxu0 %v679
        %v681 = vpop.f32.mrf.mxu0
        %v682 = vadd.f32 %v599, %v681
        %v683 = vpop.f32.mrf.mxu0
        %684 = vdwg.mxu0
        %685 = vmatprep.subr.mxu0 0.0
        %686 = vmatpush1.msra.mxu0 0.0
        %687 = vmatprep.subr.mxu0 0.0
        %688 = vmatpush1.msra.mxu0 0.0
        %689 = vmatprep.subr.mxu0 0.0
        %690 = vmatpush1.msra.mxu0 0.0
        %691 = vmatprep.subr.mxu0 0.0
        %692 = vmatpush1.msra.mxu0 0.0
        %693 = vmatprep.subr.mxu0 0.0
        %694 = vmatpush1.msra.mxu0 0.0
        %695 = vmatprep.subr.mxu0 0.0
        %696 = vmatpush1.msra.mxu0 0.0
        %697 = vmatprep.subr.mxu0 0.0
        %698 = vmatpush1.msra.mxu0 0.0
        %699 = vmatprep.subr.mxu0 0.0
        %700 = vmatpush1.msra.mxu0 0.0
        %701 = vmatprep.subr.mxu0 0.0
        %702 = vmatpush1.msra.mxu0 0.0
        %703 = vmatprep.subr.mxu0 0.0
        %704 = vmatpush1.msra.mxu0 0.0
        %705 = vmatprep.subr.mxu0 0.0
        %706 = vmatpush1.msra.mxu0 0.0
        %707 = vmatprep.subr.mxu0 0.0
        %708 = vmatpush1.msra.mxu0 0.0
        %709 = vmatprep.subr.mxu0 0.0
        %710 = vmatpush1.msra.mxu0 0.0
        %711 = vmatprep.subr.mxu0 0.0
        %712 = vmatpush1.msra.mxu0 0.0
        %713 = vmatprep.subr.mxu0 0.0
        %v714 = vand.u32 %v254, 4294901760
        %715 = vmatpush1.msra.mxu0 %v714
        %716 = vmatprep.subr.mxu0 0.0
        %v717 = vand.u32 %v253, 4294901760
        %718 = vmatpush1.msra.mxu0 %v717
        %719 = vmatprep.subr.mxu0 0.0
        %720 = vmatpush2.msra.mxu0 0.0
        %721 = vmatprep.subr.mxu0 0.0
        %722 = vmatpush2.msra.mxu0 0.0
        %723 = vmatprep.subr.mxu0 0.0
        %724 = vmatpush2.msra.mxu0 0.0
        %725 = vmatprep.subr.mxu0 0.0
        %726 = vmatpush2.msra.mxu0 0.0
        %727 = vmatprep.subr.mxu0 0.0
        %728 = vmatpush2.msra.mxu0 0.0
        %729 = vmatprep.subr.mxu0 0.0
        %730 = vmatpush2.msra.mxu0 0.0
        %731 = vmatprep.subr.mxu0 0.0
        %732 = vmatpush2.msra.mxu0 0.0
        %733 = vmatprep.subr.mxu0 0.0
        %734 = vmatpush2.msra.mxu0 0.0
        %735 = vmatprep.subr.mxu0 0.0
        %736 = vmatpush2.msra.mxu0 0.0
        %737 = vmatprep.subr.mxu0 0.0
        %738 = vmatpush2.msra.mxu0 0.0
        %739 = vmatprep.subr.mxu0 0.0
        %740 = vmatpush2.msra.mxu0 0.0
        %741 = vmatprep.subr.mxu0 0.0
        %742 = vmatpush2.msra.mxu0 0.0
        %743 = vmatprep.subr.mxu0 0.0
        %744 = vmatpush2.msra.mxu0 0.0
        %745 = vmatprep.subr.mxu0 0.0
        %746 = vmatpush2.msra.mxu0 0.0
        %747 = vmatprep.subr.mxu0 0.0
        %748 = vmatpush2.msra.mxu0 0.0
        %749 = vmatprep.subr.mxu0 0.0
        %750 = vmatpush2.msra.mxu0 0.0
        %751 = vmatprep.mubr.f32.mxu0 0.0
        %v752 = vand.u32 %v257, 4294901760
        %753 = vmatmul.mubr.f32.gmra.mxu0 %v752
        %v754 = vpop.f32.mrf.mxu0
        %v755 = vadd.f32 %v676, %v754
        %v756 = vpop.f32.mrf.mxu0
        %757 = vmatprep.mubr.f32.mxu0 0.0
        %v758 = vand.u32 %v260, 4294901760
        %759 = vmatmul.mubr.f32.gmra.mxu0 %v758
        %v760 = vpop.f32.mrf.mxu0
        %v761 = vadd.f32 %v682, %v760
        %v762 = vpop.f32.mrf.mxu0
        %763 = vdwg.mxu0
        %v764 = vadd.f32 %v249, %v755
        %v765 = vadd.f32 %v250, %v761
        %766 = vst [vmem:[#allocation2] sm:$0xff] %v764
        %767 = vst [vmem:[#allocation2 + $0x8] sm:$0xff] %v765
        %p768 = scmp.eq.s32.totalorder %s26, 3
        // Predicated region
        $region41: #{frequency_encoder_fwd.1} parent=27 // pred_check
          %p769 = pneg %p768
        $region42: #{frequency_encoder_fwd.1} parent=27 // pred_check_branch
          %771 = sbr.rel (%p769) target = $region44
        $region43: #{frequency_encoder_fwd.1} parent=27 // pred_region
          %v772 = vld [vmem:[#allocation2] sm:$0xff]
          %v773 = vld [vmem:[#allocation2 + $0x8] sm:$0xff]
          %774 = vst [vmem:[%s241] sm:$0xff] %v772
          %775 = vst [vmem:[%s241 + $0x8] sm:$0xff] %v773
        $region44: #{frequency_encoder_fwd.1} parent=27 // pred_fallthru
          _
        %s776 = smul.u32 2, %s25
        %p777 = scmp.lt.s32.totalorder %s24, 1
        %s778 = scalar_select %p777, %s24, 1
        %p779 = scmp.lt.s32.totalorder %s776, 1
        %s780 = scalar_select %p779, %s776, 1
        %s781 = smul.addr %s778, 2
        %s782 = sadd.s32 %s780, %s781
        %s783 = smul.addr %s782, 8
        %s784 = scalar_lea.vmem %s2, %s783
        // Predicated region
        $region45: #{frequency_encoder_fwd.1} parent=27 // pred_check
          %p785 = pneg %p114
        $region46: #{frequency_encoder_fwd.1} parent=27 // pred_check_branch
          %787 = sbr.rel (%p785) target = $region48
        $region47: #{frequency_encoder_fwd.1} parent=27 // pred_region
          %s788 = smul.u32 2, %s25
        $region48: #{frequency_encoder_fwd.1} parent=27 // pred_fallthru
          _
      $region28: #{frequency_encoder_fwd.1} parent=5 // pred_fallthru
        _
      %p789 = scmp.le.s32.totalorder 2, %s14
      // Predicated region
      $region49: #{frequency_encoder_fwd.1} parent=5 // pred_check
        %p790 = pneg %p789
      $region50: #{frequency_encoder_fwd.1} parent=5 // pred_check_branch
        %792 = sbr.rel (%p790) target = $region52
      $region51: #{frequency_encoder_fwd.1} parent=5 // pred_region
        %s793 = ssub.s32 %s14, 2
        // Predicated region
        $region53: #{frequency_encoder_fwd.1} parent=51 // pred_check
          %p794 = pneg %p120
        $region54: #{frequency_encoder_fwd.1} parent=51 // pred_check_branch
          %796 = sbr.rel (%p794) target = $region56
        $region55: #{frequency_encoder_fwd.1} parent=51 // pred_region
          %s797 = smul.u32 2, %s28
          %p798 = scmp.lt.s32.totalorder %s27, 1
          %s799 = scalar_select %p798, %s27, 1
          %p800 = scmp.lt.s32.totalorder %s797, 1
          %s801 = scalar_select %p800, %s797, 1
          %s802 = smul.addr %s799, 2
          %s803 = sadd.s32 %s801, %s802
          %s804 = smul.addr %s803, 8
          %s805 = scalar_lea.vmem %s2, %s804
        $region56: #{frequency_encoder_fwd.1} parent=51 // pred_fallthru
          _
      $region52: #{frequency_encoder_fwd.1} parent=5 // pred_fallthru
        _
    $region6: #{frequency_encoder_fwd.1} parent=1 // loop_footer
      %s18 = sadd.s32 1, %s14
    $region7: #{frequency_encoder_fwd.1} parent=1 // loop_footer_branch
      %13 = sbr.rel target = $region3
    $region8: #{frequency_encoder_fwd.1} parent=1 // loop_exit
      _
    %806 = vsyncpa [#allocation4], 1
    %s807 = scalar_lea.sflag [#allocation4], 1
    %808 = vsyncpa %s807, 1
    %809 = vsyncpa [#allocation6], 1
    %s810 = scalar_lea.sflag [#allocation6], 1
    %811 = vsyncpa %s810, 1

</llo_original>
